<compile_context>
chip_gen: v7x
topology: tpu7x:2x2x1
jax: 0.10.0
libtpu: 0.0.40
codegen_flags: <defaults>
</compile_context>

<pallas_src>
import jax
import jax.numpy as jnp
from jax.experimental import pallas as pl
from jax.experimental.pallas import tpu as pltpu


def _round_up(x, m):
    return (x + m - 1) // m * m


def _forget_gate_kernel(c_ref, w_ref, b_ref, o_ref):
    # c_ref: (TB, I+H)  combined activation tile (batch-tiled; last block may
    #                   be ragged — OOB rows only feed masked-out output rows)
    # w_ref: (I+H, H)   VMEM-resident packed weight (W.T)
    # b_ref: (1, H)     VMEM-resident bias
    # o_ref: (TB, H)    unpadded output tile
    acc = jnp.dot(c_ref[...], w_ref[...], preferred_element_type=jnp.float32)
    o_ref[...] = (acc + b_ref[...]).astype(o_ref.dtype)


def pack_forget_params(weight, bias, input_size, hidden_size):
    """One-time parameter packing (off the per-step hot path).

    nn.Linear stores weight as (H, I+H); we pre-transpose it so that
        cat(x, h) @ weight.T + bias == combined @ w_t + b2
    with a single MXU dot of K = I + H.
    """
    H, IH = weight.shape
    assert H == hidden_size and IH == input_size + hidden_size
    w_t = jnp.asarray(weight).T                       # (I+H, H)
    b2 = jnp.asarray(bias).reshape(1, hidden_size)    # (1, H)
    return w_t, b2


def lstm_forget_forward(new_input, previous_hidden_state, w_t, b2):
    """new_input: (B, I), previous_hidden_state: (B, H); w_t/b2 come from
    pack_forget_params. Returns the forget-gate linear output (B, H)."""
    B, I = new_input.shape
    H = previous_hidden_state.shape[1]
    K = I + H
    assert w_t.shape == (K, H) and b2.shape == (1, H)
    out_dtype = new_input.dtype
    itemsize = jnp.dtype(out_dtype).itemsize

    # Module semantics: concatenate, then one K=I+H matmul (single MXU push,
    # single input DMA stream). Tiny, XLA-fusible; replaces two tiny-K dots.
    combined = jnp.concatenate([new_input, previous_hidden_state], axis=-1)

    # Batch tile: multiple of 8 sublanes, capped at 256; for B >= 16 force
    # >= 2 grid steps so megacore ("parallel") sharding has work on v7x.
    if B >= 16:
        tb = min(_round_up(pl.cdiv(B, 2), 8), 256)
    else:
        tb = _round_up(B, 8)
    grid = (pl.cdiv(B, tb),)

    # Resident-operand specs: single-buffer them (and raise the scoped VMEM
    # limit) only once the weights are production-sized; at toy sizes keep the
    # default, known-good configuration.
    w_bytes = K * H * jnp.dtype(w_t.dtype).itemsize
    resident_kwargs = {}
    if w_bytes > (1 << 20):
        resident_kwargs["pipeline_mode"] = pl.Buffered(1)
    w_spec = pl.BlockSpec((K, H), lambda i: (0, 0), **resident_kwargs)
    b_spec = pl.BlockSpec((1, H), lambda i: (0, 0), **resident_kwargs)

    cp_kwargs = dict(dimension_semantics=("parallel",))
    n_resident_bufs = 1 if "pipeline_mode" in resident_kwargs else 2
    vmem_est = (2 * tb * K * itemsize           # combined input (double buf)
                + 2 * tb * H * itemsize         # output (double buf)
                + n_resident_bufs * (w_bytes + H * itemsize))
    if vmem_est > (16 << 20):
        cp_kwargs["vmem_limit_bytes"] = int(min(vmem_est * 5 // 4, 64 << 20))

    # Un-padded work for the scheduler hint.
    flops = 2 * B * K * H
    bytes_accessed = itemsize * (B * K + K * H + H + B * H)

    out = pl.pallas_call(
        _forget_gate_kernel,
        out_shape=jax.ShapeDtypeStruct((B, H), out_dtype),
        grid=grid,
        in_specs=[
            pl.BlockSpec((tb, K), lambda i: (i, 0)),   # combined: batch-tiled
            w_spec,                                    # weight: VMEM-resident
            b_spec,                                    # bias:   VMEM-resident
        ],
        out_specs=pl.BlockSpec((tb, H), lambda i: (i, 0)),
        compiler_params=pltpu.CompilerParams(**cp_kwargs),
        cost_estimate=pl.CostEstimate(
            flops=flops, transcendentals=0, bytes_accessed=bytes_accessed),
    )(combined, w_t, b2)
    return out


if __name__ == "__main__":
    # Small shapes consistent with the module's forward.
    batch = 8
    input_size = 16
    hidden_state_size = 32

    key = jax.random.PRNGKey(0)
    k_x, k_h, k_w, k_b = jax.random.split(key, 4)

    new_input = jax.random.normal(k_x, (batch, input_size), dtype=jnp.float32)
    previous_hidden_state = jax.random.normal(
        k_h, (batch, hidden_state_size), dtype=jnp.float32)

    # Deterministic nn.Linear-style init: U(-1/sqrt(fan_in), 1/sqrt(fan_in)).
    fan_in = input_size + hidden_state_size
    bound = 1.0 / (fan_in ** 0.5)
    weight = jax.random.uniform(
        k_w, (hidden_state_size, fan_in), minval=-bound, maxval=bound,
        dtype=jnp.float32)
    bias = jax.random.uniform(
        k_b, (hidden_state_size,), minval=-bound, maxval=bound,
        dtype=jnp.float32)

    # Parameter packing happens once (module setup), not per forward call.
    w_t, b2 = pack_forget_params(weight, bias, input_size, hidden_state_size)
    w_t, b2 = jax.block_until_ready((w_t, b2))

    fwd = jax.jit(lstm_forget_forward)
    out = fwd(new_input, previous_hidden_state, w_t, b2)
    out = jax.block_until_ready(out)

    # Pure-JAX reference check (cat + linear).
    combined = jnp.concatenate([new_input, previous_hidden_state], axis=-1)
    ref = combined @ weight.T + bias
    assert out.shape == (batch, hidden_state_size)
    assert jnp.allclose(out, ref, atol=1e-5, rtol=1e-5)

    print("KERNEL_OK")
</pallas_src>

<mosaic_0001>
module attributes {stable_mosaic.version = 11 : i64} {
  func.func @_forget_gate_kernel(%arg0: i32, %arg1: memref<8x48xf32, #tpu.memory_space<vmem>>, %arg2: memref<48x32xf32, #tpu.memory_space<vmem>>, %arg3: memref<1x32xf32, #tpu.memory_space<vmem>>, %arg4: memref<8x32xf32, #tpu.memory_space<vmem>>) attributes {dimension_semantics = [#tpu.dimension_semantics<parallel>], iteration_bounds = array<i64: 1>, scalar_prefetch = 0 : i64, scratch_operands = 0 : i64, tpu.core_type = #tpu.core_type<tc>, window_params = [{transform_indices = @transform_0, window_bounds = array<i64: 8, 48>}, {pipeline_mode = #tpu.pipeline_mode<synchronous>, transform_indices = @transform_1, window_bounds = array<i64: 48, 32>}, {pipeline_mode = #tpu.pipeline_mode<synchronous>, transform_indices = @transform_2, window_bounds = array<i64: 1, 32>}, {transform_indices = @transform_3, window_bounds = array<i64: 8, 32>}]} {
    %c0 = arith.constant 0 : index
    %c0_0 = arith.constant 0 : index
    %0 = vector.load %arg1[%c0, %c0_0] : memref<8x48xf32, #tpu.memory_space<vmem>>, vector<8x48xf32>
    %c0_1 = arith.constant 0 : index
    %c0_2 = arith.constant 0 : index
    %1 = vector.load %arg2[%c0_1, %c0_2] : memref<48x32xf32, #tpu.memory_space<vmem>>, vector<48x32xf32>
    %cst = arith.constant dense<0.000000e+00> : vector<8x32xf32>
    %2 = tpu.matmul %0, %1, %cst {dimension_numbers = #tpu.dot_dimension_numbers<[1], [0], [0], [1], [0, 0, 1, 1], [], []>} : vector<8x48xf32>, vector<48x32xf32>, vector<8x32xf32> -> vector<8x32xf32>
    %c0_3 = arith.constant 0 : index
    %c0_4 = arith.constant 0 : index
    %3 = vector.load %arg3[%c0_3, %c0_4] : memref<1x32xf32, #tpu.memory_space<vmem>>, vector<1x32xf32>
    %4 = vector.broadcast %3 : vector<1x32xf32> to vector<8x32xf32>
    %5 = arith.addf %2, %4 : vector<8x32xf32>
    %c0_5 = arith.constant 0 : index
    %c0_6 = arith.constant 0 : index
    %6 = vector.load %arg4[%c0_5, %c0_6] : memref<8x32xf32, #tpu.memory_space<vmem>>, vector<8x32xf32>
    tpu.vector_store %arg4[%c0_5, %c0_6], %5 {strides = array<i32>} : memref<8x32xf32, #tpu.memory_space<vmem>>, vector<8x32xf32>,
    return
  }
  func.func @transform_0(%arg0: i32) -> (i32, i32) {
    %c0_i32 = arith.constant 0 : i32
    %c0_i32_0 = arith.constant 0 : i32
    return %arg0, %c0_i32 : i32, i32
  }
  func.func @transform_1(%arg0: i32) -> (i32, i32) {
    %c0_i32 = arith.constant 0 : i32
    %c0_i32_0 = arith.constant 0 : i32
    %c0_i32_1 = arith.constant 0 : i32
    return %c0_i32, %c0_i32_0 : i32, i32
  }
  func.func @transform_2(%arg0: i32) -> (i32, i32) {
    %c0_i32 = arith.constant 0 : i32
    %c0_i32_0 = arith.constant 0 : i32
    %c0_i32_1 = arith.constant 0 : i32
    return %c0_i32, %c0_i32_0 : i32, i32
  }
  func.func @transform_3(%arg0: i32) -> (i32, i32) {
    %c0_i32 = arith.constant 0 : i32
    %c0_i32_0 = arith.constant 0 : i32
    return %arg0, %c0_i32 : i32, i32
  }
}

</mosaic_0001>

<llo_original>
// kernel: lstm_forget_forward.1
$region0: #{lstm_forget_forward.1}
  #allocation0 [shape = 'u32[]', space=smem, size = 0x4, offset = 0x4, fixed_abs, tag = 'smem constant byte address 0x4 - core index']
  #allocation1 [shape = 'u32[144,128]{1,0:T(1,128)}', space=vmem, size = 0x12000, scoped, tag = 'internal scratch']
  %s0 = inlined_call_operand.vmem [shape: f32[8,48], index: 0, kind: input, shape index: {}]
  %s1 = inlined_call_operand.vmem [shape: f32[48,32], index: 1, kind: input, shape index: {}]
  %s2 = inlined_call_operand.vmem [shape: f32[1,32], index: 2, kind: input, shape index: {}]
  %s3 = inlined_call_operand.hbm [shape: f32[8,32], index: 3, kind: output, shape index: {}]
  %s4 = sld [smem:[#allocation0]]
  $region22: #{lstm_forget_forward.1} parent=0
    _
  %s6 = ssub.s32 1, %s4
  %s7 = scalar_select 0, %s6, %s4
  $region1: #{lstm_forget_forward.1} parent=0
    #allocation2 [shape = 'u8[4096]{0}', space=vmem, size = 0x1000, scoped, tag = 'output window, operand 0, single buffered']
    #allocation3 [shape = 's32[1]{0}', space=sflag, size = 0x4, scoped, tag = 'scoped memory for lstm_forget_forward.1']
    %8 = vsyncpa [#allocation3], 0
    // Predicated region
    $region2: #{lstm_forget_forward.1} parent=1 // pred_check
      _
    $region3: #{lstm_forget_forward.1} parent=1 // pred_check_branch
      %10 = sbr.rel (0) target = $region5
    $region4: #{lstm_forget_forward.1} parent=1 // pred_region
      _
    $region5: #{lstm_forget_forward.1} parent=1 // pred_fallthru
      _
    // Predicated region
    $region6: #{lstm_forget_forward.1} parent=1 // pred_check
      _
    $region7: #{lstm_forget_forward.1} parent=1 // pred_check_branch
      %12 = sbr.rel (0) target = $region9
    $region8: #{lstm_forget_forward.1} parent=1 // pred_region
      _
    $region9: #{lstm_forget_forward.1} parent=1 // pred_fallthru
      _
    // Predicated region
    $region10: #{lstm_forget_forward.1} parent=1 // pred_check
      _
    $region11: #{lstm_forget_forward.1} parent=1 // pred_check_branch
      %14 = sbr.rel (0) target = $region13
    $region12: #{lstm_forget_forward.1} parent=1 // pred_region
      _
    $region13: #{lstm_forget_forward.1} parent=1 // pred_fallthru
      _
    %v15 = vld [vmem:[%s0] sm:$0xff]
    %v16 = vld [vmem:[%s1] sm:$0xff]
    %v17 = vld [vmem:[%s1 + $0x8] sm:$0xff]
    %v18 = vld [vmem:[%s1 + $0x10] sm:$0xff]
    %v19 = vld [vmem:[%s1 + $0x18] sm:$0xff]
    %v20 = vld [vmem:[%s1 + $0x20] sm:$0xff]
    %v21 = vld [vmem:[%s1 + $0x28] sm:$0xff]
    %v22 = vld [vmem:[%s2] sm:$0x1]
    %v24 = vlaneseq
    %v25 = vshrl.u32 %v24, 7
    %v26 = vsub.s32 0, %v25
    %v27 = vrot.slane %v22, %v26
    %vm29 = vcmask 392192
    %v31 = vsel %vm29, %v15, 0
    %33 = vmatprep.subr.mxu0 0.0
    %34 = vmatpush1.msra.mxu0 %v16
    %35 = vmatprep.subr.mxu0 0.0
    %36 = vmatpush1.msra.mxu0 %v17
    %37 = vmatprep.subr.mxu0 0.0
    %38 = vmatpush1.msra.mxu0 %v18
    %39 = vmatprep.subr.mxu0 0.0
    %40 = vmatpush1.msra.mxu0 %v19
    %41 = vmatprep.subr.mxu0 0.0
    %42 = vmatpush1.msra.mxu0 %v20
    %43 = vmatprep.subr.mxu0 0.0
    %44 = vmatpush1.msra.mxu0 %v21
    %45 = vmatprep.subr.mxu0 0.0
    %46 = vmatpush1.msra.mxu0 0.0
    %47 = vmatprep.subr.mxu0 0.0
    %48 = vmatpush1.msra.mxu0 0.0
    %49 = vmatprep.subr.mxu0 0.0
    %50 = vmatpush1.msra.mxu0 0.0
    %51 = vmatprep.subr.mxu0 0.0
    %52 = vmatpush1.msra.mxu0 0.0
    %53 = vmatprep.subr.mxu0 0.0
    %54 = vmatpush1.msra.mxu0 0.0
    %55 = vmatprep.subr.mxu0 0.0
    %56 = vmatpush1.msra.mxu0 0.0
    %57 = vmatprep.subr.mxu0 0.0
    %58 = vmatpush1.msra.mxu0 0.0
    %59 = vmatprep.subr.mxu0 0.0
    %60 = vmatpush1.msra.mxu0 0.0
    %61 = vmatprep.subr.mxu0 0.0
    %62 = vmatpush1.msra.mxu0 0.0
    %63 = vmatprep.subr.mxu0 0.0
    %64 = vmatpush1.msra.mxu0 0.0
    %65 = vmatprep.subr.mxu0 0.0
    %66 = vmatpush1.msra.mxu0 0.0
    %67 = vmatprep.subr.mxu0 0.0
    %68 = vmatpush1.msra.mxu0 0.0
    %69 = vmatprep.subr.mxu0 0.0
    %70 = vmatpush1.msra.mxu0 0.0
    %71 = vmatprep.subr.mxu0 0.0
    %72 = vmatpush1.msra.mxu0 0.0
    %73 = vmatprep.subr.mxu0 0.0
    %74 = vmatpush1.msra.mxu0 0.0
    %75 = vmatprep.subr.mxu0 0.0
    %76 = vmatpush1.msra.mxu0 0.0
    %77 = vmatprep.subr.mxu0 0.0
    %78 = vmatpush1.msra.mxu0 0.0
    %79 = vmatprep.subr.mxu0 0.0
    %80 = vmatpush1.msra.mxu0 0.0
    %81 = vmatprep.subr.mxu0 0.0
    %82 = vmatpush1.msra.mxu0 0.0
    %83 = vmatprep.subr.mxu0 0.0
    %84 = vmatpush1.msra.mxu0 0.0
    %85 = vmatprep.subr.mxu0 0.0
    %86 = vmatpush1.msra.mxu0 0.0
    %87 = vmatprep.subr.mxu0 0.0
    %88 = vmatpush1.msra.mxu0 0.0
    %89 = vmatprep.subr.mxu0 0.0
    %90 = vmatpush1.msra.mxu0 0.0
    %91 = vmatprep.subr.mxu0 0.0
    %92 = vmatpush1.msra.mxu0 0.0
    %93 = vmatprep.subr.mxu0 0.0
    %94 = vmatpush1.msra.mxu0 0.0
    %95 = vmatprep.subr.mxu0 0.0
    %96 = vmatpush1.msra.mxu0 0.0
    %97 = vmatprep.mubr.f32.mxu0 0.0
    %98 = vmatmul.mubr.f32.gmra.mrb[0].mxu0 %v31
    %v99 = vpop.f32.mrb[0].mxu0
    %v100 = vadd.f32 %v27, %v99
    %v101 = vpop.f32.mrb[0].mxu0
    %102 = vdwg.mxu0
    %vm103 = vcmask 261120
    %104 = vst.msk [vmem:[#allocation2] sm:$0xff] %vm103, %v100
    // Predicated region
    $region14: #{lstm_forget_forward.1} parent=1 // pred_check
      _
    $region15: #{lstm_forget_forward.1} parent=1 // pred_check_branch
      %106 = sbr.rel (0) target = $region17
    $region16: #{lstm_forget_forward.1} parent=1 // pred_region
      %s108 = ssub.s32 128, 128
      %109 = vsyncadd [#allocation3], %s108
      %s111 = sshll.u32 [#allocation2], 4
      %s112 = int_to_ptr.vmem [resolvable:$true] %s111
      %114 = dma.vmem_to_hbm [thread:$0]  %s112, 128, %s3, [#allocation3]
    $region17: #{lstm_forget_forward.1} parent=1 // pred_fallthru
      _
    // Predicated region
    $region18: #{lstm_forget_forward.1} parent=1 // pred_check
      _
    $region19: #{lstm_forget_forward.1} parent=1 // pred_check_branch
      %116 = sbr.rel (0) target = $region21
    $region20: #{lstm_forget_forward.1} parent=1 // pred_region
      %117 = dma.done [#allocation3], 128
    $region21: #{lstm_forget_forward.1} parent=1 // pred_fallthru
      _
    %118 = vsyncpa [#allocation3], 1

</llo_original>
